<compile_context>
chip_gen: v7x
topology: tpu7x:2x2x1
jax: 0.10.0
libtpu: 0.0.40
codegen_flags: <defaults>
</compile_context>

<pallas_src>
import math
import jax
import jax.numpy as jnp
from jax.experimental import pallas as pl
from jax.experimental.pallas import tpu as pltpu


def _round_up(n, m):
    return ((n + m - 1) // m) * m


def maxout_net_kernel(
    x_ref,
    w1_ref, b1_ref,   # (31, 62), (1, 62)   -> maxout over halves of width 31
    w2_ref, b2_ref,   # (31, 20), (1, 20)   -> maxout over halves of width 10
    w3_ref, b3_ref,   # (10, 10), (1, 10)   -> maxout over halves of width 5
    wo_ref, bo_ref,   # (5, 2),   (1, 2)    -> final linear
    o_ref,            # (TB, 2)
):
    x = x_ref[...].astype(w1_ref.dtype)                       # (TB, 31)

    def fused_maxout(h, w_ref, b_ref, out_width):
        # One MXU matmul covering both maxout pieces, f32 accumulation.
        s = jnp.dot(h, w_ref[...], preferred_element_type=jnp.float32) + b_ref[...]
        # Static split at the true piece width; 2*out_width < 128 so both halves
        # stay inside one lane tile (pure VPU max, no cross-tile copies).
        return jnp.maximum(s[:, :out_width], s[:, out_width:])

    h1 = fused_maxout(x, w1_ref, b1_ref, 31)                   # (TB, 31) f32
    h2 = fused_maxout(h1.astype(w2_ref.dtype), w2_ref, b2_ref, 10)   # (TB, 10)
    h3 = fused_maxout(h2.astype(w3_ref.dtype), w3_ref, b3_ref, 5)    # (TB, 5)

    out = jnp.dot(h3.astype(wo_ref.dtype), wo_ref[...],
                  preferred_element_type=jnp.float32) + bo_ref[...]  # (TB, 2)
    o_ref[...] = out.astype(o_ref.dtype)


def pack_params(params, compute_dtype=jnp.float32):
    """Fuse the two maxout pieces per layer into one (in, 2*out) weight + (1, 2*out) bias."""
    cat = lambda a, b: jnp.concatenate([a, b], axis=1)
    return {
        "w1": cat(params["w1a"], params["w1b"]).astype(compute_dtype),   # (31, 62)
        "b1": cat(params["b1a"], params["b1b"]).astype(jnp.float32),     # (1, 62)
        "w2": cat(params["w2a"], params["w2b"]).astype(compute_dtype),   # (31, 20)
        "b2": cat(params["b2a"], params["b2b"]).astype(jnp.float32),     # (1, 20)
        "w3": cat(params["w3a"], params["w3b"]).astype(compute_dtype),   # (10, 10)
        "b3": cat(params["b3a"], params["b3b"]).astype(jnp.float32),     # (1, 10)
        "wo": params["wo"].astype(compute_dtype),                        # (5, 2)
        "bo": params["bo"].astype(jnp.float32),                          # (1, 2)
    }


def maxout_net_forward(x, params, *, batch_tile=1024, compute_dtype=jnp.float32):
    """x: (B, 31).  params: raw per-piece weights (see init_params).

    batch_tile: rows processed per grid step (sweep 512..4096 for large B).
    compute_dtype: jnp.float32 or jnp.bfloat16 for x / weights (f32 accumulation).
    """
    B, F_in = x.shape
    assert F_in == 31

    packed = pack_params(params, compute_dtype)

    # Effective tile: never larger than the (8-padded) batch, always a multiple of 8.
    bt = min(batch_tile, _round_up(B, 8))
    bt = _round_up(bt, 8)
    B_pad = _round_up(B, bt)

    xp = x.astype(compute_dtype)
    if B_pad != B:
        xp = jnp.pad(xp, ((0, B_pad - B), (0, 0)))

    weight_args = (packed["w1"], packed["b1"], packed["w2"], packed["b2"],
                   packed["w3"], packed["b3"], packed["wo"], packed["bo"])

    def const_spec(arr):
        # Constant index_map => block never changes; the pipeline does not re-DMA it.
        return pl.BlockSpec(arr.shape, lambda i: (0, 0))

    in_specs = [pl.BlockSpec((bt, F_in), lambda i: (i, 0))]
    in_specs += [const_spec(a) for a in weight_args]
    out_spec = pl.BlockSpec((bt, 2), lambda i: (i, 0))

    out = pl.pallas_call(
        maxout_net_kernel,
        out_shape=jax.ShapeDtypeStruct((B_pad, 2), jnp.float32),
        grid_spec=pltpu.PrefetchScalarGridSpec(
            num_scalar_prefetch=0,
            grid=(B_pad // bt,),
            in_specs=in_specs,
            out_specs=out_spec,
        ),
        compiler_params=pltpu.CompilerParams(
            dimension_semantics=("parallel",),   # batch axis shards across TCs on v7x
        ),
    )(xp, *weight_args)

    return out[:B]


def init_params(key):
    """Deterministic parameter init mimicking nn.Linear (uniform ±1/sqrt(fan_in)).
    Weights stored transposed as (in_features, out_features); biases as (1, out)."""
    specs = {
        "1a": (31, 31), "1b": (31, 31),
        "2a": (31, 10), "2b": (31, 10),
        "3a": (10, 5),  "3b": (10, 5),
        "o":  (5, 2),
    }
    params = {}
    for name, (fan_in, fan_out) in specs.items():
        key, kw, kb = jax.random.split(key, 3)
        bound = 1.0 / math.sqrt(fan_in)
        params[f"w{name}"] = jax.random.uniform(
            kw, (fan_in, fan_out), jnp.float32, minval=-bound, maxval=bound)
        params[f"b{name}"] = jax.random.uniform(
            kb, (1, fan_out), jnp.float32, minval=-bound, maxval=bound)
    return params


def reference_forward(x, p):
    """Pure-JAX reference of the same forward pass (eval-mode dropout = identity)."""
    h1 = jnp.maximum(x @ p["w1a"] + p["b1a"], x @ p["w1b"] + p["b1b"])
    h2 = jnp.maximum(h1 @ p["w2a"] + p["b2a"], h1 @ p["w2b"] + p["b2b"])
    h3 = jnp.maximum(h2 @ p["w3a"] + p["b3a"], h2 @ p["w3b"] + p["b3b"])
    return h3 @ p["wo"] + p["bo"]


if __name__ == "__main__":
    key = jax.random.PRNGKey(0)
    kx, kp = jax.random.split(key)
    params = init_params(kp)

    # 1) Small single-step check (f32, exact parity with the reference).
    B = 8
    x = jax.random.normal(kx, (B, 31), jnp.float32)
    out = jax.block_until_ready(maxout_net_forward(x, params))
    ref = reference_forward(x, params)
    assert out.shape == (B, 2)
    assert jnp.allclose(out, ref, atol=1e-5, rtol=1e-5), "f32 mismatch vs reference"

    # 2) Multi-step grid + batch padding path (B not a multiple of the tile).
    B2 = 70
    x2 = jax.random.normal(jax.random.PRNGKey(1), (B2, 31), jnp.float32)
    out2 = jax.block_until_ready(maxout_net_forward(x2, params, batch_tile=32))
    ref2 = reference_forward(x2, params)
    assert out2.shape == (B2, 2)
    assert jnp.allclose(out2, ref2, atol=1e-5, rtol=1e-5), "tiled f32 mismatch"

    # 3) bf16 activations/weights (halves HBM traffic on v6e/v7x), f32 accumulation.
    out3 = jax.block_until_ready(
        maxout_net_forward(x2, params, batch_tile=32, compute_dtype=jnp.bfloat16))
    assert out3.shape == (B2, 2)
    assert bool(jnp.all(jnp.isfinite(out3)))
    assert jnp.allclose(out3, ref2, atol=1e-1, rtol=1e-1), "bf16 path diverged"

    print("KERNEL_OK")
</pallas_src>

<mosaic_0001>
module attributes {stable_mosaic.version = 11 : i64} {
  func.func @maxout_net_kernel(%arg0: i32, %arg1: memref<8x31xf32, #tpu.memory_space<vmem>>, %arg2: memref<31x62xf32, #tpu.memory_space<vmem>>, %arg3: memref<1x62xf32, #tpu.memory_space<vmem>>, %arg4: memref<31x20xf32, #tpu.memory_space<vmem>>, %arg5: memref<1x20xf32, #tpu.memory_space<vmem>>, %arg6: memref<10x10xf32, #tpu.memory_space<vmem>>, %arg7: memref<1x10xf32, #tpu.memory_space<vmem>>, %arg8: memref<5x2xf32, #tpu.memory_space<vmem>>, %arg9: memref<1x2xf32, #tpu.memory_space<vmem>>, %arg10: memref<8x2xf32, #tpu.memory_space<vmem>>) attributes {dimension_semantics = [#tpu.dimension_semantics<parallel>], iteration_bounds = array<i64: 1>, scalar_prefetch = 0 : i64, scratch_operands = 0 : i64, tpu.core_type = #tpu.core_type<tc>, window_params = [{transform_indices = @transform_0, window_bounds = array<i64: 8, 31>}, {pipeline_mode = #tpu.pipeline_mode<synchronous>, transform_indices = @transform_1, window_bounds = array<i64: 31, 62>}, {pipeline_mode = #tpu.pipeline_mode<synchronous>, transform_indices = @transform_2, window_bounds = array<i64: 1, 62>}, {pipeline_mode = #tpu.pipeline_mode<synchronous>, transform_indices = @transform_3, window_bounds = array<i64: 31, 20>}, {pipeline_mode = #tpu.pipeline_mode<synchronous>, transform_indices = @transform_4, window_bounds = array<i64: 1, 20>}, {pipeline_mode = #tpu.pipeline_mode<synchronous>, transform_indices = @transform_5, window_bounds = array<i64: 10, 10>}, {pipeline_mode = #tpu.pipeline_mode<synchronous>, transform_indices = @transform_6, window_bounds = array<i64: 1, 10>}, {pipeline_mode = #tpu.pipeline_mode<synchronous>, transform_indices = @transform_7, window_bounds = array<i64: 5, 2>}, {pipeline_mode = #tpu.pipeline_mode<synchronous>, transform_indices = @transform_8, window_bounds = array<i64: 1, 2>}, {transform_indices = @transform_9, window_bounds = array<i64: 8, 2>}]} {
    %c0 = arith.constant 0 : index
    %c0_0 = arith.constant 0 : index
    %0 = vector.load %arg1[%c0, %c0_0] : memref<8x31xf32, #tpu.memory_space<vmem>>, vector<8x31xf32>
    %c0_1 = arith.constant 0 : index
    %c0_2 = arith.constant 0 : index
    %1 = vector.load %arg2[%c0_1, %c0_2] : memref<31x62xf32, #tpu.memory_space<vmem>>, vector<31x62xf32>
    %cst = arith.constant dense<0.000000e+00> : vector<8x62xf32>
    %2 = tpu.matmul %0, %1, %cst {dimension_numbers = #tpu.dot_dimension_numbers<[1], [0], [0], [1], [0, 0, 1, 1], [], []>} : vector<8x31xf32>, vector<31x62xf32>, vector<8x62xf32> -> vector<8x62xf32>
    %c0_3 = arith.constant 0 : index
    %c0_4 = arith.constant 0 : index
    %3 = vector.load %arg3[%c0_3, %c0_4] : memref<1x62xf32, #tpu.memory_space<vmem>>, vector<1x62xf32>
    %4 = vector.broadcast %3 : vector<1x62xf32> to vector<8x62xf32>
    %5 = arith.addf %2, %4 : vector<8x62xf32>
    %6 = vector.extract_strided_slice %5 {offsets = [0, 0], sizes = [8, 31], strides = [1, 1]} : vector<8x62xf32> to vector<8x31xf32>
    %7 = vector.extract_strided_slice %5 {offsets = [0, 31], sizes = [8, 31], strides = [1, 1]} : vector<8x62xf32> to vector<8x31xf32>
    %8 = arith.maximumf %6, %7 : vector<8x31xf32>
    %c0_5 = arith.constant 0 : index
    %c0_6 = arith.constant 0 : index
    %9 = vector.load %arg4[%c0_5, %c0_6] : memref<31x20xf32, #tpu.memory_space<vmem>>, vector<31x20xf32>
    %cst_7 = arith.constant dense<0.000000e+00> : vector<8x20xf32>
    %10 = tpu.matmul %8, %9, %cst_7 {dimension_numbers = #tpu.dot_dimension_numbers<[1], [0], [0], [1], [0, 0, 1, 1], [], []>} : vector<8x31xf32>, vector<31x20xf32>, vector<8x20xf32> -> vector<8x20xf32>
    %c0_8 = arith.constant 0 : index
    %c0_9 = arith.constant 0 : index
    %11 = vector.load %arg5[%c0_8, %c0_9] : memref<1x20xf32, #tpu.memory_space<vmem>>, vector<1x20xf32>
    %12 = vector.broadcast %11 : vector<1x20xf32> to vector<8x20xf32>
    %13 = arith.addf %10, %12 : vector<8x20xf32>
    %14 = vector.extract_strided_slice %13 {offsets = [0, 0], sizes = [8, 10], strides = [1, 1]} : vector<8x20xf32> to vector<8x10xf32>
    %15 = vector.extract_strided_slice %13 {offsets = [0, 10], sizes = [8, 10], strides = [1, 1]} : vector<8x20xf32> to vector<8x10xf32>
    %16 = arith.maximumf %14, %15 : vector<8x10xf32>
    %c0_10 = arith.constant 0 : index
    %c0_11 = arith.constant 0 : index
    %17 = vector.load %arg6[%c0_10, %c0_11] : memref<10x10xf32, #tpu.memory_space<vmem>>, vector<10x10xf32>
    %cst_12 = arith.constant dense<0.000000e+00> : vector<8x10xf32>
    %18 = tpu.matmul %16, %17, %cst_12 {dimension_numbers = #tpu.dot_dimension_numbers<[1], [0], [0], [1], [0, 0, 1, 1], [], []>} : vector<8x10xf32>, vector<10x10xf32>, vector<8x10xf32> -> vector<8x10xf32>
    %c0_13 = arith.constant 0 : index
    %c0_14 = arith.constant 0 : index
    %19 = vector.load %arg7[%c0_13, %c0_14] : memref<1x10xf32, #tpu.memory_space<vmem>>, vector<1x10xf32>
    %20 = vector.broadcast %19 : vector<1x10xf32> to vector<8x10xf32>
    %21 = arith.addf %18, %20 : vector<8x10xf32>
    %22 = vector.extract_strided_slice %21 {offsets = [0, 0], sizes = [8, 5], strides = [1, 1]} : vector<8x10xf32> to vector<8x5xf32>
    %23 = vector.extract_strided_slice %21 {offsets = [0, 5], sizes = [8, 5], strides = [1, 1]} : vector<8x10xf32> to vector<8x5xf32>
    %24 = arith.maximumf %22, %23 : vector<8x5xf32>
    %c0_15 = arith.constant 0 : index
    %c0_16 = arith.constant 0 : index
    %25 = vector.load %arg8[%c0_15, %c0_16] : memref<5x2xf32, #tpu.memory_space<vmem>>, vector<5x2xf32>
    %cst_17 = arith.constant dense<0.000000e+00> : vector<8x2xf32>
    %26 = tpu.matmul %24, %25, %cst_17 {dimension_numbers = #tpu.dot_dimension_numbers<[1], [0], [0], [1], [0, 0, 1, 1], [], []>} : vector<8x5xf32>, vector<5x2xf32>, vector<8x2xf32> -> vector<8x2xf32>
    %c0_18 = arith.constant 0 : index
    %c0_19 = arith.constant 0 : index
    %27 = vector.load %arg9[%c0_18, %c0_19] : memref<1x2xf32, #tpu.memory_space<vmem>>, vector<1x2xf32>
    %28 = vector.broadcast %27 : vector<1x2xf32> to vector<8x2xf32>
    %29 = arith.addf %26, %28 : vector<8x2xf32>
    %c0_20 = arith.constant 0 : index
    %c0_21 = arith.constant 0 : index
    %30 = vector.load %arg10[%c0_20, %c0_21] : memref<8x2xf32, #tpu.memory_space<vmem>>, vector<8x2xf32>
    tpu.vector_store %arg10[%c0_20, %c0_21], %29 {strides = array<i32>} : memref<8x2xf32, #tpu.memory_space<vmem>>, vector<8x2xf32>,
    return
  }
  func.func @transform_0(%arg0: i32) -> (i32, i32) {
    %c0_i32 = arith.constant 0 : i32
    %c0_i32_0 = arith.constant 0 : i32
    return %arg0, %c0_i32 : i32, i32
  }
  func.func @transform_1(%arg0: i32) -> (i32, i32) {
    %c0_i32 = arith.constant 0 : i32
    %c0_i32_0 = arith.constant 0 : i32
    %c0_i32_1 = arith.constant 0 : i32
    return %c0_i32, %c0_i32_0 : i32, i32
  }
  func.func @transform_2(%arg0: i32) -> (i32, i32) {
    %c0_i32 = arith.constant 0 : i32
    %c0_i32_0 = arith.constant 0 : i32
    %c0_i32_1 = arith.constant 0 : i32
    return %c0_i32, %c0_i32_0 : i32, i32
  }
  func.func @transform_3(%arg0: i32) -> (i32, i32) {
    %c0_i32 = arith.constant 0 : i32
    %c0_i32_0 = arith.constant 0 : i32
    %c0_i32_1 = arith.constant 0 : i32
    return %c0_i32, %c0_i32_0 : i32, i32
  }
  func.func @transform_4(%arg0: i32) -> (i32, i32) {
    %c0_i32 = arith.constant 0 : i32
    %c0_i32_0 = arith.constant 0 : i32
    %c0_i32_1 = arith.constant 0 : i32
    return %c0_i32, %c0_i32_0 : i32, i32
  }
  func.func @transform_5(%arg0: i32) -> (i32, i32) {
    %c0_i32 = arith.constant 0 : i32
    %c0_i32_0 = arith.constant 0 : i32
    %c0_i32_1 = arith.constant 0 : i32
    return %c0_i32, %c0_i32_0 : i32, i32
  }
  func.func @transform_6(%arg0: i32) -> (i32, i32) {
    %c0_i32 = arith.constant 0 : i32
    %c0_i32_0 = arith.constant 0 : i32
    %c0_i32_1 = arith.constant 0 : i32
    return %c0_i32, %c0_i32_0 : i32, i32
  }
  func.func @transform_7(%arg0: i32) -> (i32, i32) {
    %c0_i32 = arith.constant 0 : i32
    %c0_i32_0 = arith.constant 0 : i32
    %c0_i32_1 = arith.constant 0 : i32
    return %c0_i32, %c0_i32_0 : i32, i32
  }
  func.func @transform_8(%arg0: i32) -> (i32, i32) {
    %c0_i32 = arith.constant 0 : i32
    %c0_i32_0 = arith.constant 0 : i32
    %c0_i32_1 = arith.constant 0 : i32
    return %c0_i32, %c0_i32_0 : i32, i32
  }
  func.func @transform_9(%arg0: i32) -> (i32, i32) {
    %c0_i32 = arith.constant 0 : i32
    %c0_i32_0 = arith.constant 0 : i32
    return %arg0, %c0_i32 : i32, i32
  }
}

</mosaic_0001>

<llo_original>
// kernel: tpu_custom_call.1
$region0: #{tpu_custom_call.1}
  #allocation0 [shape = 'u32[]', space=smem, size = 0x4, offset = 0x4, fixed_abs, tag = 'smem constant byte address 0x4 - core index']
  #allocation1 [shape = 'u32[144,128]{1,0:T(1,128)}', space=vmem, size = 0x12000, scoped, tag = 'internal scratch']
  %s0 = inlined_call_operand.vmem [shape: f32[8,31], index: 0, kind: input, shape index: {}]
  %s1 = inlined_call_operand.vmem [shape: f32[31,62], index: 1, kind: input, shape index: {}]
  %s2 = inlined_call_operand.vmem [shape: f32[1,62], index: 2, kind: input, shape index: {}]
  %s3 = inlined_call_operand.vmem [shape: f32[31,20], index: 3, kind: input, shape index: {}]
  %s4 = inlined_call_operand.vmem [shape: f32[1,20], index: 4, kind: input, shape index: {}]
  %s5 = inlined_call_operand.vmem [shape: f32[10,10], index: 5, kind: input, shape index: {}]
  %s6 = inlined_call_operand.vmem [shape: f32[1,10], index: 6, kind: input, shape index: {}]
  %s7 = inlined_call_operand.vmem [shape: f32[5,2], index: 7, kind: input, shape index: {}]
  %s8 = inlined_call_operand.vmem [shape: f32[1,2], index: 8, kind: input, shape index: {}]
  %s9 = inlined_call_operand.vmem [shape: f32[8,2], index: 9, kind: output, shape index: {}]
  %s10 = sld [smem:[#allocation0]]
  $region46: #{tpu_custom_call.1} parent=0
    _
  %s12 = ssub.s32 1, %s10
  %s13 = scalar_select 0, %s12, %s10
  // Predicated region
  $region2: #{tpu_custom_call.1} parent=0 // pred_check
    _
  $region3: #{tpu_custom_call.1} parent=0 // pred_check_branch
    %15 = sbr.rel (0) target = $region5
  $region4: #{tpu_custom_call.1} parent=0 // pred_region
    _
  $region5: #{tpu_custom_call.1} parent=0 // pred_fallthru
    _
  // Predicated region
  $region6: #{tpu_custom_call.1} parent=0 // pred_check
    _
  $region7: #{tpu_custom_call.1} parent=0 // pred_check_branch
    %17 = sbr.rel (0) target = $region9
  $region8: #{tpu_custom_call.1} parent=0 // pred_region
    _
  $region9: #{tpu_custom_call.1} parent=0 // pred_fallthru
    _
  // Predicated region
  $region10: #{tpu_custom_call.1} parent=0 // pred_check
    _
  $region11: #{tpu_custom_call.1} parent=0 // pred_check_branch
    %19 = sbr.rel (0) target = $region13
  $region12: #{tpu_custom_call.1} parent=0 // pred_region
    _
  $region13: #{tpu_custom_call.1} parent=0 // pred_fallthru
    _
  // Predicated region
  $region14: #{tpu_custom_call.1} parent=0 // pred_check
    _
  $region15: #{tpu_custom_call.1} parent=0 // pred_check_branch
    %21 = sbr.rel (0) target = $region17
  $region16: #{tpu_custom_call.1} parent=0 // pred_region
    _
  $region17: #{tpu_custom_call.1} parent=0 // pred_fallthru
    _
  // Predicated region
  $region18: #{tpu_custom_call.1} parent=0 // pred_check
    _
  $region19: #{tpu_custom_call.1} parent=0 // pred_check_branch
    %23 = sbr.rel (0) target = $region21
  $region20: #{tpu_custom_call.1} parent=0 // pred_region
    _
  $region21: #{tpu_custom_call.1} parent=0 // pred_fallthru
    _
  // Predicated region
  $region22: #{tpu_custom_call.1} parent=0 // pred_check
    _
  $region23: #{tpu_custom_call.1} parent=0 // pred_check_branch
    %25 = sbr.rel (0) target = $region25
  $region24: #{tpu_custom_call.1} parent=0 // pred_region
    _
  $region25: #{tpu_custom_call.1} parent=0 // pred_fallthru
    _
  // Predicated region
  $region26: #{tpu_custom_call.1} parent=0 // pred_check
    _
  $region27: #{tpu_custom_call.1} parent=0 // pred_check_branch
    %27 = sbr.rel (0) target = $region29
  $region28: #{tpu_custom_call.1} parent=0 // pred_region
    _
  $region29: #{tpu_custom_call.1} parent=0 // pred_fallthru
    _
  // Predicated region
  $region30: #{tpu_custom_call.1} parent=0 // pred_check
    _
  $region31: #{tpu_custom_call.1} parent=0 // pred_check_branch
    %29 = sbr.rel (0) target = $region33
  $region32: #{tpu_custom_call.1} parent=0 // pred_region
    _
  $region33: #{tpu_custom_call.1} parent=0 // pred_fallthru
    _
  // Predicated region
  $region34: #{tpu_custom_call.1} parent=0 // pred_check
    _
  $region35: #{tpu_custom_call.1} parent=0 // pred_check_branch
    %31 = sbr.rel (0) target = $region37
  $region36: #{tpu_custom_call.1} parent=0 // pred_region
    _
  $region37: #{tpu_custom_call.1} parent=0 // pred_fallthru
    _
  %v32 = vld [vmem:[%s0] sm:$0xff]
  %v33 = vld [vmem:[%s1] sm:$0xff]
  %v34 = vld [vmem:[%s1 + $0x8] sm:$0xff]
  %v35 = vld [vmem:[%s1 + $0x10] sm:$0xff]
  %v36 = vld [vmem:[%s1 + $0x18] sm:$0x7f]
  %v37 = vld [vmem:[%s2] sm:$0x1]
  %v39 = vlaneseq
  %v40 = vshrl.u32 %v39, 7
  %v41 = vsub.s32 0, %v40
  %v42 = vrot.slane %v37, %v41
  %vm44 = vcmask 252928
  %v46 = vsel %vm44, %v32, 0
  %vm48 = vcmask 1046528
  %v50 = vsel %vm48, %v36, 0
  %52 = vmatprep.subr.mxu0 0.0
  %53 = vmatpush1.msra.mxu0 %v33
  %54 = vmatprep.subr.mxu0 0.0
  %55 = vmatpush1.msra.mxu0 %v34
  %56 = vmatprep.subr.mxu0 0.0
  %57 = vmatpush1.msra.mxu0 %v35
  %58 = vmatprep.subr.mxu0 0.0
  %59 = vmatpush1.msra.mxu0 %v50
  %60 = vmatprep.subr.mxu0 0.0
  %61 = vmatpush1.msra.mxu0 0.0
  %62 = vmatprep.subr.mxu0 0.0
  %63 = vmatpush1.msra.mxu0 0.0
  %64 = vmatprep.subr.mxu0 0.0
  %65 = vmatpush1.msra.mxu0 0.0
  %66 = vmatprep.subr.mxu0 0.0
  %67 = vmatpush1.msra.mxu0 0.0
  %68 = vmatprep.subr.mxu0 0.0
  %69 = vmatpush1.msra.mxu0 0.0
  %70 = vmatprep.subr.mxu0 0.0
  %71 = vmatpush1.msra.mxu0 0.0
  %72 = vmatprep.subr.mxu0 0.0
  %73 = vmatpush1.msra.mxu0 0.0
  %74 = vmatprep.subr.mxu0 0.0
  %75 = vmatpush1.msra.mxu0 0.0
  %76 = vmatprep.subr.mxu0 0.0
  %77 = vmatpush1.msra.mxu0 0.0
  %78 = vmatprep.subr.mxu0 0.0
  %79 = vmatpush1.msra.mxu0 0.0
  %80 = vmatprep.subr.mxu0 0.0
  %81 = vmatpush1.msra.mxu0 0.0
  %82 = vmatprep.subr.mxu0 0.0
  %83 = vmatpush1.msra.mxu0 0.0
  %84 = vmatprep.subr.mxu0 0.0
  %85 = vmatpush1.msra.mxu0 0.0
  %86 = vmatprep.subr.mxu0 0.0
  %87 = vmatpush1.msra.mxu0 0.0
  %88 = vmatprep.subr.mxu0 0.0
  %89 = vmatpush1.msra.mxu0 0.0
  %90 = vmatprep.subr.mxu0 0.0
  %91 = vmatpush1.msra.mxu0 0.0
  %92 = vmatprep.subr.mxu0 0.0
  %93 = vmatpush1.msra.mxu0 0.0
  %94 = vmatprep.subr.mxu0 0.0
  %95 = vmatpush1.msra.mxu0 0.0
  %96 = vmatprep.subr.mxu0 0.0
  %97 = vmatpush1.msra.mxu0 0.0
  %98 = vmatprep.subr.mxu0 0.0
  %99 = vmatpush1.msra.mxu0 0.0
  %100 = vmatprep.subr.mxu0 0.0
  %101 = vmatpush1.msra.mxu0 0.0
  %102 = vmatprep.subr.mxu0 0.0
  %103 = vmatpush1.msra.mxu0 0.0
  %104 = vmatprep.subr.mxu0 0.0
  %105 = vmatpush1.msra.mxu0 0.0
  %106 = vmatprep.subr.mxu0 0.0
  %107 = vmatpush1.msra.mxu0 0.0
  %108 = vmatprep.subr.mxu0 0.0
  %109 = vmatpush1.msra.mxu0 0.0
  %110 = vmatprep.subr.mxu0 0.0
  %111 = vmatpush1.msra.mxu0 0.0
  %112 = vmatprep.subr.mxu0 0.0
  %113 = vmatpush1.msra.mxu0 0.0
  %114 = vmatprep.subr.mxu0 0.0
  %115 = vmatpush1.msra.mxu0 0.0
  %116 = vmatprep.mubr.f32.mxu0 0.0
  %117 = vmatmul.mubr.f32.gmra.mrb[0].mxu0 %v46
  %v118 = vpop.f32.mrb[0].mxu0
  %v119 = vadd.f32 %v42, %v118
  %v120 = vpop.f32.mrb[0].mxu0
  %121 = vdwg.mxu0
  %123 = vrot.lane.b32.xlu0 %v119, 97
  %v124 = vpop.permute.xlu0 %123
  %v126 = vmax.f32 %v119, %v124
  %v127 = vld [vmem:[%s3] sm:$0xff]
  %v128 = vld [vmem:[%s3 + $0x8] sm:$0xff]
  %v129 = vld [vmem:[%s3 + $0x10] sm:$0xff]
  %v130 = vld [vmem:[%s3 + $0x18] sm:$0x7f]
  %v131 = vld [vmem:[%s4] sm:$0x1]
  %v133 = vlaneseq
  %v134 = vshrl.u32 %v133, 7
  %v135 = vsub.s32 0, %v134
  %v136 = vrot.slane %v131, %v135
  %v139 = vsel %vm44, %v126, 0
  %v142 = vsel %vm48, %v130, 0
  %144 = vmatprep.subr.mxu0 0.0
  %145 = vmatpush1.msra.mxu0 %v127
  %146 = vmatprep.subr.mxu0 0.0
  %147 = vmatpush1.msra.mxu0 %v128
  %148 = vmatprep.subr.mxu0 0.0
  %149 = vmatpush1.msra.mxu0 %v129
  %150 = vmatprep.subr.mxu0 0.0
  %151 = vmatpush1.msra.mxu0 %v142
  %152 = vmatprep.subr.mxu0 0.0
  %153 = vmatpush1.msra.mxu0 0.0
  %154 = vmatprep.subr.mxu0 0.0
  %155 = vmatpush1.msra.mxu0 0.0
  %156 = vmatprep.subr.mxu0 0.0
  %157 = vmatpush1.msra.mxu0 0.0
  %158 = vmatprep.subr.mxu0 0.0
  %159 = vmatpush1.msra.mxu0 0.0
  %160 = vmatprep.subr.mxu0 0.0
  %161 = vmatpush1.msra.mxu0 0.0
  %162 = vmatprep.subr.mxu0 0.0
  %163 = vmatpush1.msra.mxu0 0.0
  %164 = vmatprep.subr.mxu0 0.0
  %165 = vmatpush1.msra.mxu0 0.0
  %166 = vmatprep.subr.mxu0 0.0
  %167 = vmatpush1.msra.mxu0 0.0
  %168 = vmatprep.subr.mxu0 0.0
  %169 = vmatpush1.msra.mxu0 0.0
  %170 = vmatprep.subr.mxu0 0.0
  %171 = vmatpush1.msra.mxu0 0.0
  %172 = vmatprep.subr.mxu0 0.0
  %173 = vmatpush1.msra.mxu0 0.0
  %174 = vmatprep.subr.mxu0 0.0
  %175 = vmatpush1.msra.mxu0 0.0
  %176 = vmatprep.subr.mxu0 0.0
  %177 = vmatpush1.msra.mxu0 0.0
  %178 = vmatprep.subr.mxu0 0.0
  %179 = vmatpush1.msra.mxu0 0.0
  %180 = vmatprep.subr.mxu0 0.0
  %181 = vmatpush1.msra.mxu0 0.0
  %182 = vmatprep.subr.mxu0 0.0
  %183 = vmatpush1.msra.mxu0 0.0
  %184 = vmatprep.subr.mxu0 0.0
  %185 = vmatpush1.msra.mxu0 0.0
  %186 = vmatprep.subr.mxu0 0.0
  %187 = vmatpush1.msra.mxu0 0.0
  %188 = vmatprep.subr.mxu0 0.0
  %189 = vmatpush1.msra.mxu0 0.0
  %190 = vmatprep.subr.mxu0 0.0
  %191 = vmatpush1.msra.mxu0 0.0
  %192 = vmatprep.subr.mxu0 0.0
  %193 = vmatpush1.msra.mxu0 0.0
  %194 = vmatprep.subr.mxu0 0.0
  %195 = vmatpush1.msra.mxu0 0.0
  %196 = vmatprep.subr.mxu0 0.0
  %197 = vmatpush1.msra.mxu0 0.0
  %198 = vmatprep.subr.mxu0 0.0
  %199 = vmatpush1.msra.mxu0 0.0
  %200 = vmatprep.subr.mxu0 0.0
  %201 = vmatpush1.msra.mxu0 0.0
  %202 = vmatprep.subr.mxu0 0.0
  %203 = vmatpush1.msra.mxu0 0.0
  %204 = vmatprep.subr.mxu0 0.0
  %205 = vmatpush1.msra.mxu0 0.0
  %206 = vmatprep.subr.mxu0 0.0
  %207 = vmatpush1.msra.mxu0 0.0
  %208 = vmatprep.mubr.f32.mxu0 0.0
  %209 = vmatmul.mubr.f32.gmra.mrb[0].mxu0 %v139
  %v210 = vpop.f32.mrb[0].mxu0
  %v211 = vadd.f32 %v136, %v210
  %v212 = vpop.f32.mrb[0].mxu0
  %213 = vdwg.mxu0
  %215 = vrot.lane.b32.xlu0 %v211, 118
  %v216 = vpop.permute.xlu0 %215
  %v218 = vmax.f32 %v211, %v216
  %v219 = vld [vmem:[%s5] sm:$0xff]
  %v220 = vld [vmem:[%s5 + $0x8] sm:$0x3]
  %v221 = vld [vmem:[%s6] sm:$0x1]
  %v223 = vlaneseq
  %v224 = vshrl.u32 %v223, 7
  %v225 = vsub.s32 0, %v224
  %v226 = vrot.slane %v221, %v225
  %vm228 = vcmask 80896
  %v230 = vsel %vm228, %v218, 0
  %vm232 = vcmask 1041408
  %v234 = vsel %vm232, %v220, 0
  %236 = vmatprep.subr.mxu0 0.0
  %237 = vmatpush1.msra.mxu0 %v219
  %238 = vmatprep.subr.mxu0 0.0
  %239 = vmatpush1.msra.mxu0 %v234
  %240 = vmatprep.subr.mxu0 0.0
  %241 = vmatpush1.msra.mxu0 0.0
  %242 = vmatprep.subr.mxu0 0.0
  %243 = vmatpush1.msra.mxu0 0.0
  %244 = vmatprep.subr.mxu0 0.0
  %245 = vmatpush1.msra.mxu0 0.0
  %246 = vmatprep.subr.mxu0 0.0
  %247 = vmatpush1.msra.mxu0 0.0
  %248 = vmatprep.subr.mxu0 0.0
  %249 = vmatpush1.msra.mxu0 0.0
  %250 = vmatprep.subr.mxu0 0.0
  %251 = vmatpush1.msra.mxu0 0.0
  %252 = vmatprep.subr.mxu0 0.0
  %253 = vmatpush1.msra.mxu0 0.0
  %254 = vmatprep.subr.mxu0 0.0
  %255 = vmatpush1.msra.mxu0 0.0
  %256 = vmatprep.subr.mxu0 0.0
  %257 = vmatpush1.msra.mxu0 0.0
  %258 = vmatprep.subr.mxu0 0.0
  %259 = vmatpush1.msra.mxu0 0.0
  %260 = vmatprep.subr.mxu0 0.0
  %261 = vmatpush1.msra.mxu0 0.0
  %262 = vmatprep.subr.mxu0 0.0
  %263 = vmatpush1.msra.mxu0 0.0
  %264 = vmatprep.subr.mxu0 0.0
  %265 = vmatpush1.msra.mxu0 0.0
  %266 = vmatprep.subr.mxu0 0.0
  %267 = vmatpush1.msra.mxu0 0.0
  %268 = vmatprep.subr.mxu0 0.0
  %269 = vmatpush1.msra.mxu0 0.0
  %270 = vmatprep.subr.mxu0 0.0
  %271 = vmatpush1.msra.mxu0 0.0
  %272 = vmatprep.subr.mxu0 0.0
  %273 = vmatpush1.msra.mxu0 0.0
  %274 = vmatprep.subr.mxu0 0.0
  %275 = vmatpush1.msra.mxu0 0.0
  %276 = vmatprep.subr.mxu0 0.0
  %277 = vmatpush1.msra.mxu0 0.0
  %278 = vmatprep.subr.mxu0 0.0
  %279 = vmatpush1.msra.mxu0 0.0
  %280 = vmatprep.subr.mxu0 0.0
  %281 = vmatpush1.msra.mxu0 0.0
  %282 = vmatprep.subr.mxu0 0.0
  %283 = vmatpush1.msra.mxu0 0.0
  %284 = vmatprep.subr.mxu0 0.0
  %285 = vmatpush1.msra.mxu0 0.0
  %286 = vmatprep.subr.mxu0 0.0
  %287 = vmatpush1.msra.mxu0 0.0
  %288 = vmatprep.subr.mxu0 0.0
  %289 = vmatpush1.msra.mxu0 0.0
  %290 = vmatprep.subr.mxu0 0.0
  %291 = vmatpush1.msra.mxu0 0.0
  %292 = vmatprep.subr.mxu0 0.0
  %293 = vmatpush1.msra.mxu0 0.0
  %294 = vmatprep.subr.mxu0 0.0
  %295 = vmatpush1.msra.mxu0 0.0
  %296 = vmatprep.subr.mxu0 0.0
  %297 = vmatpush1.msra.mxu0 0.0
  %298 = vmatprep.subr.mxu0 0.0
  %299 = vmatpush1.msra.mxu0 0.0
  %300 = vmatprep.mubr.f32.mxu0 0.0
  %301 = vmatmul.mubr.f32.gmra.mrb[0].mxu0 %v230
  %v302 = vpop.f32.mrb[0].mxu0
  %v303 = vadd.f32 %v226, %v302
  %v304 = vpop.f32.mrb[0].mxu0
  %305 = vdwg.mxu0
  %307 = vrot.lane.b32.xlu0 %v303, 123
  %v308 = vpop.permute.xlu0 %307
  %v310 = vmax.f32 %v303, %v308
  %v311 = vld [vmem:[%s7] sm:$0x1f]
  %v312 = vld [vmem:[%s8] sm:$0x1]
  %v314 = vlaneseq
  %v315 = vshrl.u32 %v314, 7
  %v316 = vsub.s32 0, %v315
  %v317 = vrot.slane %v312, %v316
  %vm319 = vcmask 39936
  %v321 = vsel %vm319, %v310, 0
  %vm323 = vcmask 1044480
  %v325 = vsel %vm323, %v311, 0
  %327 = vmatprep.subr.mxu0 0.0
  %328 = vmatpush1.msra.mxu0 %v325
  %329 = vmatprep.subr.mxu0 0.0
  %330 = vmatpush1.msra.mxu0 0.0
  %331 = vmatprep.subr.mxu0 0.0
  %332 = vmatpush1.msra.mxu0 0.0
  %333 = vmatprep.subr.mxu0 0.0
  %334 = vmatpush1.msra.mxu0 0.0
  %335 = vmatprep.subr.mxu0 0.0
  %336 = vmatpush1.msra.mxu0 0.0
  %337 = vmatprep.subr.mxu0 0.0
  %338 = vmatpush1.msra.mxu0 0.0
  %339 = vmatprep.subr.mxu0 0.0
  %340 = vmatpush1.msra.mxu0 0.0
  %341 = vmatprep.subr.mxu0 0.0
  %342 = vmatpush1.msra.mxu0 0.0
  %343 = vmatprep.subr.mxu0 0.0
  %344 = vmatpush1.msra.mxu0 0.0
  %345 = vmatprep.subr.mxu0 0.0
  %346 = vmatpush1.msra.mxu0 0.0
  %347 = vmatprep.subr.mxu0 0.0
  %348 = vmatpush1.msra.mxu0 0.0
  %349 = vmatprep.subr.mxu0 0.0
  %350 = vmatpush1.msra.mxu0 0.0
  %351 = vmatprep.subr.mxu0 0.0
  %352 = vmatpush1.msra.mxu0 0.0
  %353 = vmatprep.subr.mxu0 0.0
  %354 = vmatpush1.msra.mxu0 0.0
  %355 = vmatprep.subr.mxu0 0.0
  %356 = vmatpush1.msra.mxu0 0.0
  %357 = vmatprep.subr.mxu0 0.0
  %358 = vmatpush1.msra.mxu0 0.0
  %359 = vmatprep.subr.mxu0 0.0
  %360 = vmatpush1.msra.mxu0 0.0
  %361 = vmatprep.subr.mxu0 0.0
  %362 = vmatpush1.msra.mxu0 0.0
  %363 = vmatprep.subr.mxu0 0.0
  %364 = vmatpush1.msra.mxu0 0.0
  %365 = vmatprep.subr.mxu0 0.0
  %366 = vmatpush1.msra.mxu0 0.0
  %367 = vmatprep.subr.mxu0 0.0
  %368 = vmatpush1.msra.mxu0 0.0
  %369 = vmatprep.subr.mxu0 0.0
  %370 = vmatpush1.msra.mxu0 0.0
  %371 = vmatprep.subr.mxu0 0.0
  %372 = vmatpush1.msra.mxu0 0.0
  %373 = vmatprep.subr.mxu0 0.0
  %374 = vmatpush1.msra.mxu0 0.0
  %375 = vmatprep.subr.mxu0 0.0
  %376 = vmatpush1.msra.mxu0 0.0
  %377 = vmatprep.subr.mxu0 0.0
  %378 = vmatpush1.msra.mxu0 0.0
  %379 = vmatprep.subr.mxu0 0.0
  %380 = vmatpush1.msra.mxu0 0.0
  %381 = vmatprep.subr.mxu0 0.0
  %382 = vmatpush1.msra.mxu0 0.0
  %383 = vmatprep.subr.mxu0 0.0
  %384 = vmatpush1.msra.mxu0 0.0
  %385 = vmatprep.subr.mxu0 0.0
  %386 = vmatpush1.msra.mxu0 0.0
  %387 = vmatprep.subr.mxu0 0.0
  %388 = vmatpush1.msra.mxu0 0.0
  %389 = vmatprep.subr.mxu0 0.0
  %390 = vmatpush1.msra.mxu0 0.0
  %391 = vmatprep.mubr.f32.mxu0 0.0
  %392 = vmatmul.mubr.f32.gmra.mrb[0].mxu0 %v321
  %v393 = vpop.f32.mrb[0].mxu0
  %v394 = vadd.f32 %v317, %v393
  %v395 = vpop.f32.mrb[0].mxu0
  %396 = vdwg.mxu0
  %vm397 = vcmask 15360
  %398 = vst.msk [vmem:[%s9] sm:$0xff] %vm397, %v394
  // Predicated region
  $region38: #{tpu_custom_call.1} parent=0 // pred_check
    _
  $region39: #{tpu_custom_call.1} parent=0 // pred_check_branch
    %400 = sbr.rel (0) target = $region41
  $region40: #{tpu_custom_call.1} parent=0 // pred_region
    _
  $region41: #{tpu_custom_call.1} parent=0 // pred_fallthru
    _
  // Predicated region
  $region42: #{tpu_custom_call.1} parent=0 // pred_check
    _
  $region43: #{tpu_custom_call.1} parent=0 // pred_check_branch
    %402 = sbr.rel (0) target = $region45
  $region44: #{tpu_custom_call.1} parent=0 // pred_region
    _
  $region45: #{tpu_custom_call.1} parent=0 // pred_fallthru
    _

</llo_original>
